<compile_context>
chip_gen: v7x
topology: tpu7x:2x2x1
jax: 0.10.0
libtpu: 0.0.40
codegen_flags: <defaults>
</compile_context>

<pallas_src>
import jax
import jax.numpy as jnp
from jax import lax
from jax.experimental import pallas as pl
from jax.experimental.pallas import tpu as pltpu

_LANE = 128
_SUBLANE = 8
_TILE = _SUBLANE * _LANE                 # 1024: minimal f32 vreg-aligned element count
_TARGET_BLOCK_BYTES = 2 * 1024 * 1024    # ~2 MiB per stream per buffer
_MAX_BLOCK_ROWS = 8192
_VMEM_LIMIT_BYTES = 32 * 1024 * 1024     # covers v5e's 16 MiB scoped default


# ---------------------------------------------------------------------------
# Elementwise loss math (shared by kernel, tail and fallback paths; f32).
# ---------------------------------------------------------------------------
def _elementwise_loss(p, t, loss_type, huber_delta, quantile_alpha):
    if loss_type == "mse":
        d = p - t
        return d * d
    if loss_type == "mae":
        return jnp.abs(p - t)
    if loss_type in ("huber", "smooth_l1"):
        delta = huber_delta if loss_type == "huber" else 1.0
        a = jnp.abs(p - t)
        return jnp.where(a < delta, 0.5 * a * a, delta * (a - 0.5 * delta))
    if loss_type == "quantile":
        r = t - p
        return jnp.maximum(quantile_alpha * r, (quantile_alpha - 1.0) * r)
    if loss_type == "mape":
        eps = 1e-8
        return jnp.abs((t - p) / (t + eps)) * 100.0
    raise ValueError(f"unsupported loss_type: {loss_type}")


def _jax_loss(p, t, w, loss_type, huber_delta, quantile_alpha):
    loss = _elementwise_loss(p.astype(jnp.float32), t.astype(jnp.float32),
                             loss_type, huber_delta, quantile_alpha)
    if w is not None:
        loss = loss * w.astype(jnp.float32)
    return loss


def _tile_partial_sum(x):
    # (block_rows, 128) -> (8, 128) via pure VPU adds (leading-axis reduce).
    return x.reshape(-1, _SUBLANE, _LANE).sum(axis=0)


# ---------------------------------------------------------------------------
# Kernel bodies.
# ---------------------------------------------------------------------------
def _make_map_kernel(loss_type, huber_delta, quantile_alpha, has_weights):
    """reduction='none': elementwise loss, streamed block by block."""

    def kernel(*refs):
        if has_weights:
            pred_ref, tgt_ref, w_ref, out_ref = refs
        else:
            pred_ref, tgt_ref, out_ref = refs
            w_ref = None

        p = pred_ref[...].astype(jnp.float32)
        t = tgt_ref[...].astype(jnp.float32)
        loss = _elementwise_loss(p, t, loss_type, huber_delta, quantile_alpha)
        if has_weights:
            loss = loss * w_ref[...].astype(jnp.float32)
        out_ref[...] = loss.astype(out_ref.dtype)

    return kernel


def _make_reduce_kernel(loss_type, huber_delta, quantile_alpha, has_weights,
                        total_steps, steps_per_core, block_rows, valid_rows_last,
                        ncores):
    """reduction='sum'/'mean': per-core (8,128) f32 partial-sum accumulator."""
    needs_row_mask = valid_rows_last != block_rows       # static
    uneven_split = total_steps != ncores * steps_per_core  # static

    def kernel(*refs):
        if has_weights:
            pred_ref, tgt_ref, w_ref, out_ref = refs
        else:
            pred_ref, tgt_ref, out_ref = refs
            w_ref = None

        c = pl.program_id(0)           # core (leading "parallel" axis)
        s = pl.program_id(1)           # streaming step on this core
        step = c * steps_per_core + s  # global block index

        @pl.when(s == 0)
        def _init():
            out_ref[...] = jnp.zeros_like(out_ref)

        def _accumulate():
            p = pred_ref[...].astype(jnp.float32)
            t = tgt_ref[...].astype(jnp.float32)
            loss = _elementwise_loss(p, t, loss_type, huber_delta, quantile_alpha)
            if has_weights:
                loss = loss * w_ref[...].astype(jnp.float32)

            if needs_row_mask:
                # Only the globally-last block has stale/invalid rows in its
                # VMEM window; build the mask only there (select, not multiply,
                # so NaN/Inf garbage can never poison the sum).
                @pl.when(step == total_steps - 1)
                def _last():
                    row = lax.broadcasted_iota(jnp.int32, loss.shape, 0)
                    masked = jnp.where(row < valid_rows_last, loss, 0.0)
                    out_ref[0] += _tile_partial_sum(masked)

                @pl.when(step != total_steps - 1)
                def _full():
                    out_ref[0] += _tile_partial_sum(loss)
            else:
                out_ref[0] += _tile_partial_sum(loss)

        if uneven_split:
            pl.when(step < total_steps)(_accumulate)   # skip the padded step
        else:
            _accumulate()

    return kernel


# ---------------------------------------------------------------------------
# Wrapper.
# ---------------------------------------------------------------------------
def regression_loss(predictions, targets, *, loss_type="mse", reduction="mean",
                    huber_delta=1.0, quantile_alpha=0.5, weights=None,
                    min_pallas_elements=65536):
    """JAX/Pallas equivalent of RegressionLoss.forward (loss computed in f32)."""
    loss_type = loss_type.lower()
    supported = ("mse", "mae", "huber", "smooth_l1", "quantile", "mape")
    if loss_type not in supported:
        raise ValueError(f"unsupported loss: {loss_type}; supported: {supported}")
    if reduction not in ("mean", "sum", "none"):
        raise ValueError(f"unsupported reduction: {reduction}")

    p = jnp.squeeze(jnp.asarray(predictions))
    t = jnp.squeeze(jnp.asarray(targets))
    if p.shape != t.shape:
        raise ValueError(f"shape mismatch: {p.shape} vs {t.shape}")
    out_shape_none = p.shape

    p_flat = p.reshape(-1)           # native dtype; upcast happens in-kernel
    t_flat = t.reshape(-1)
    n = int(p_flat.shape[0])

    has_weights = weights is not None
    w_flat = None
    if has_weights:
        w_flat = jnp.asarray(weights).reshape(-1)
        if int(w_flat.shape[0]) != n:
            raise ValueError(f"weights size mismatch: {int(w_flat.shape[0])} vs {n}")

    dtypes = [p_flat.dtype, t_flat.dtype] + ([w_flat.dtype] if has_weights else [])
    out_dtype = jnp.result_type(*dtypes)

    # ---- Small-input fallback: launch/per-step overhead dominates. ----------
    if n < max(_TILE, min_pallas_elements):
        loss = _jax_loss(p_flat, t_flat, w_flat, loss_type, huber_delta, quantile_alpha)
        if reduction == "mean":
            return jnp.mean(loss)
        if reduction == "sum":
            return jnp.sum(loss)
        return loss.astype(out_dtype).reshape(out_shape_none)

    # ---- Split into a 1024-aligned prefix (kernel) and a tiny tail (JAX). ---
    n_main = (n // _TILE) * _TILE
    n_tail = n - n_main                        # 0..1023 elements
    rows = n_main // _LANE                     # multiple of 8

    inputs = [p_flat[:n_main].reshape(rows, _LANE),
              t_flat[:n_main].reshape(rows, _LANE)]
    itemsize = max(p_flat.dtype.itemsize, t_flat.dtype.itemsize)
    if has_weights:
        inputs.append(w_flat[:n_main].reshape(rows, _LANE))
        itemsize = max(itemsize, w_flat.dtype.itemsize)

    # ~2 MiB per stream per buffer, rounded to a multiple of 8 rows.
    br = (_TARGET_BLOCK_BYTES // (_LANE * itemsize)) // _SUBLANE * _SUBLANE
    br = max(_SUBLANE, min(br, _MAX_BLOCK_ROWS, rows))
    total_steps = -(-rows // br)

    tail_args = (loss_type, huber_delta, quantile_alpha)
    compiler_params_kw = dict(vmem_limit_bytes=_VMEM_LIMIT_BYTES)

    # ------------------------------- 'none' ---------------------------------
    if reduction == "none":
        kernel = _make_map_kernel(loss_type, huber_delta, quantile_alpha, has_weights)
        tile_spec = pl.BlockSpec((br, _LANE), lambda i: (i, 0))
        main_out = pl.pallas_call(
            kernel,
            out_shape=jax.ShapeDtypeStruct((rows, _LANE), out_dtype),
            grid=(total_steps,),
            in_specs=[tile_spec] * len(inputs),
            out_specs=pl.BlockSpec((br, _LANE), lambda i: (i, 0)),
            compiler_params=pltpu.CompilerParams(
                dimension_semantics=("parallel",), **compiler_params_kw),
        )(*inputs).reshape(-1)

        if n_tail:
            tail_loss = _jax_loss(p_flat[n_main:], t_flat[n_main:],
                                  w_flat[n_main:] if has_weights else None,
                                  *tail_args).astype(out_dtype)
            main_out = jnp.concatenate([main_out, tail_loss])
        return main_out.reshape(out_shape_none)

    # ----------------------------- 'sum' / 'mean' ---------------------------
    ncores = 2 if total_steps >= 2 else 1      # engage both v7x TCs; no-op on 1-TC chips
    steps_per_core = -(-total_steps // ncores)
    valid_rows_last = rows - (total_steps - 1) * br

    kernel = _make_reduce_kernel(loss_type, huber_delta, quantile_alpha, has_weights,
                                 total_steps, steps_per_core, br, valid_rows_last,
                                 ncores)

    def in_map(c, s):
        # Clamp padded steps (uneven core split) onto the last valid block;
        # their contribution is skipped inside the kernel.
        return (jnp.minimum(c * steps_per_core + s, total_steps - 1), 0)

    partials = pl.pallas_call(
        kernel,
        out_shape=jax.ShapeDtypeStruct((ncores, _SUBLANE, _LANE), jnp.float32),
        grid=(ncores, steps_per_core),
        in_specs=[pl.BlockSpec((br, _LANE), in_map)] * len(inputs),
        out_specs=pl.BlockSpec((1, _SUBLANE, _LANE), lambda c, s: (c, 0, 0)),
        compiler_params=pltpu.CompilerParams(
            dimension_semantics=("parallel", "arbitrary"), **compiler_params_kw),
    )(*inputs)

    total = jnp.sum(partials)                  # tiny (ncores,8,128) reduce in XLA
    if n_tail:
        tail_loss = _jax_loss(p_flat[n_main:], t_flat[n_main:],
                              w_flat[n_main:] if has_weights else None, *tail_args)
        total = total + jnp.sum(tail_loss)

    if reduction == "mean":
        # Matches the PyTorch module: mean divides by element count (not sum(w)).
        total = total / jnp.float32(n)
    return total


# ---------------------------------------------------------------------------
# Reference + self-test.
# ---------------------------------------------------------------------------
def _reference(p, t, loss_type, reduction, huber_delta, quantile_alpha, w):
    p = jnp.squeeze(p).astype(jnp.float32)
    t = jnp.squeeze(t).astype(jnp.float32)
    loss = _elementwise_loss(p, t, loss_type, huber_delta, quantile_alpha)
    if w is not None:
        loss = loss * w.astype(jnp.float32)
    if reduction == "mean":
        return loss.mean()
    if reduction == "sum":
        return loss.sum()
    return loss


if __name__ == "__main__":
    key = jax.random.PRNGKey(0)
    ok = True

    def check(batch, loss_types, reductions, with_weight_opts):
        global ok
        kp, kt, kw = jax.random.split(jax.random.fold_in(key, batch), 3)
        predictions = jax.random.normal(kp, (batch, 1), jnp.float32)
        targets = jax.random.normal(kt, (batch, 1), jnp.float32)
        weights = jax.random.uniform(kw, (batch,), jnp.float32) + 0.5
        for loss_type in loss_types:
            for reduction in reductions:
                for use_w in with_weight_opts:
                    w = weights if use_w else None
                    out = regression_loss(predictions, targets,
                                          loss_type=loss_type, reduction=reduction,
                                          huber_delta=1.0, quantile_alpha=0.5,
                                          weights=w, min_pallas_elements=0)
                    out = jax.block_until_ready(out)
                    ref = _reference(predictions, targets, loss_type, reduction,
                                     1.0, 0.5, w)
                    if not jnp.allclose(out, ref, rtol=2e-4, atol=1e-5):
                        ok = False

    # Ragged size: exercises the kernel main slab + partial last block + JAX tail.
    check(3000, ["mse", "mae", "huber", "smooth_l1", "quantile", "mape"],
          ["mean", "sum", "none"], [True, False])
    # Exactly tile-aligned size: exercises the mask-free / no-tail path.
    check(2048, ["mse", "mae"], ["mean", "none"], [False])

    if ok:
        print("KERNEL_OK")
</pallas_src>

<mosaic_0001>
module attributes {stable_mosaic.version = 11 : i64} {
  func.func @kernel(%arg0: i32, %arg1: i32, %arg2: memref<16x128xf32, #tpu.memory_space<vmem>>, %arg3: memref<16x128xf32, #tpu.memory_space<vmem>>, %arg4: memref<16x128xf32, #tpu.memory_space<vmem>>, %arg5: memref<1x8x128xf32, #tpu.memory_space<vmem>>) attributes {dimension_semantics = [#tpu.dimension_semantics<parallel>, #tpu.dimension_semantics<arbitrary>], iteration_bounds = array<i64: 1, 1>, scalar_prefetch = 0 : i64, scratch_operands = 0 : i64, tpu.core_type = #tpu.core_type<tc>, window_params = [{transform_indices = @transform_0, window_bounds = array<i64: 16, 128>}, {transform_indices = @transform_1, window_bounds = array<i64: 16, 128>}, {transform_indices = @transform_2, window_bounds = array<i64: 16, 128>}, {transform_indices = @transform_3, window_bounds = array<i64: 1, 8, 128>}]} {
    %c0_i32 = arith.constant 0 : i32
    %0 = arith.cmpi eq, %arg1, %c0_i32 : i32
    %1 = arith.extui %0 : i1 to i32
    %c0_i32_0 = arith.constant 0 : i32
    %2 = arith.cmpi ne, %1, %c0_i32_0 : i32
    scf.if %2 {
      %cst_12 = arith.constant 0.000000e+00 : f32
      %17 = vector.broadcast %cst_12 : f32 to vector<1x8x128xf32>
      %c0_13 = arith.constant 0 : index
      %c0_14 = arith.constant 0 : index
      %c0_15 = arith.constant 0 : index
      %18 = vector.load %arg5[%c0_13, %c0_14, %c0_15] : memref<1x8x128xf32, #tpu.memory_space<vmem>>, vector<1x8x128xf32>
      tpu.vector_store %arg5[%c0_13, %c0_14, %c0_15], %17 {strides = array<i32>} : memref<1x8x128xf32, #tpu.memory_space<vmem>>, vector<1x8x128xf32>,
    } else {
    }
    %c0 = arith.constant 0 : index
    %c0_1 = arith.constant 0 : index
    %3 = vector.load %arg2[%c0, %c0_1] : memref<16x128xf32, #tpu.memory_space<vmem>>, vector<16x128xf32>
    %c0_2 = arith.constant 0 : index
    %c0_3 = arith.constant 0 : index
    %4 = vector.load %arg3[%c0_2, %c0_3] : memref<16x128xf32, #tpu.memory_space<vmem>>, vector<16x128xf32>
    %5 = arith.subf %3, %4 : vector<16x128xf32>
    %6 = arith.mulf %5, %5 : vector<16x128xf32>
    %c0_4 = arith.constant 0 : index
    %c0_5 = arith.constant 0 : index
    %7 = vector.load %arg4[%c0_4, %c0_5] : memref<16x128xf32, #tpu.memory_space<vmem>>, vector<16x128xf32>
    %8 = arith.mulf %6, %7 : vector<16x128xf32>
    %c0_6 = arith.constant 0 : index
    %c0_7 = arith.constant 0 : index
    %c0_8 = arith.constant 0 : index
    %9 = vector.load %arg5[%c0_6, %c0_7, %c0_8] : memref<1x8x128xf32, #tpu.memory_space<vmem>>, vector<1x8x128xf32>
    %10 = vector.shape_cast %9 : vector<1x8x128xf32> to vector<8x128xf32>
    %11 = vector.shape_cast %8 : vector<16x128xf32> to vector<2x8x128xf32>
    %cst = arith.constant dense<0.000000e+00> : vector<8x128xf32>
    %12 = vector.multi_reduction <add>, %11, %cst [0] : vector<2x8x128xf32> to vector<8x128xf32>
    %13 = arith.addf %10, %12 : vector<8x128xf32>
    %c0_9 = arith.constant 0 : index
    %c0_10 = arith.constant 0 : index
    %c0_11 = arith.constant 0 : index
    %14 = vector.load %arg5[%c0_9, %c0_10, %c0_11] : memref<1x8x128xf32, #tpu.memory_space<vmem>>, vector<1x8x128xf32>
    %15 = vector.shape_cast %14 : vector<1x8x128xf32> to vector<8x128xf32>
    %16 = vector.shape_cast %13 : vector<8x128xf32> to vector<1x8x128xf32>
    tpu.vector_store %arg5[%c0_9, %c0_10, %c0_11], %16 {strides = array<i32>} : memref<1x8x128xf32, #tpu.memory_space<vmem>>, vector<1x8x128xf32>,
    return
  }
  func.func @transform_0(%arg0: i32, %arg1: i32) -> (i32, i32) {
    %c1_i32 = arith.constant 1 : i32
    %0 = arith.muli %arg0, %c1_i32 : i32
    %1 = arith.addi %0, %arg1 : i32
    %c0_i32 = arith.constant 0 : i32
    %2 = arith.minsi %1, %c0_i32 : i32
    %c0_i32_0 = arith.constant 0 : i32
    %c0_i32_1 = arith.constant 0 : i32
    return %2, %c0_i32_0 : i32, i32
  }
  func.func @transform_1(%arg0: i32, %arg1: i32) -> (i32, i32) {
    %c1_i32 = arith.constant 1 : i32
    %0 = arith.muli %arg0, %c1_i32 : i32
    %1 = arith.addi %0, %arg1 : i32
    %c0_i32 = arith.constant 0 : i32
    %2 = arith.minsi %1, %c0_i32 : i32
    %c0_i32_0 = arith.constant 0 : i32
    %c0_i32_1 = arith.constant 0 : i32
    return %2, %c0_i32_0 : i32, i32
  }
  func.func @transform_2(%arg0: i32, %arg1: i32) -> (i32, i32) {
    %c1_i32 = arith.constant 1 : i32
    %0 = arith.muli %arg0, %c1_i32 : i32
    %1 = arith.addi %0, %arg1 : i32
    %c0_i32 = arith.constant 0 : i32
    %2 = arith.minsi %1, %c0_i32 : i32
    %c0_i32_0 = arith.constant 0 : i32
    %c0_i32_1 = arith.constant 0 : i32
    return %2, %c0_i32_0 : i32, i32
  }
  func.func @transform_3(%arg0: i32, %arg1: i32) -> (i32, i32, i32) {
    %c0_i32 = arith.constant 0 : i32
    %c0_i32_0 = arith.constant 0 : i32
    %c0_i32_1 = arith.constant 0 : i32
    return %arg0, %c0_i32, %c0_i32_0 : i32, i32, i32
  }
}

</mosaic_0001>

<llo_original>
// kernel: tpu_custom_call.1
$region0: #{tpu_custom_call.1}
  #allocation0 [shape = 'u32[]', space=smem, size = 0x4, offset = 0x4, fixed_abs, tag = 'smem constant byte address 0x4 - core index']
  #allocation1 [shape = 'u32[144,128]{1,0:T(1,128)}', space=vmem, size = 0x12000, scoped, tag = 'internal scratch']
  %s0 = inlined_call_operand.hbm [shape: f32[16,128], index: 0, kind: input, shape index: {}]
  %s1 = inlined_call_operand.hbm [shape: f32[16,128], index: 1, kind: input, shape index: {}]
  %s2 = inlined_call_operand.hbm [shape: f32[16,128], index: 2, kind: input, shape index: {}]
  %s3 = inlined_call_operand.hbm [shape: f32[1,8,128], index: 3, kind: output, shape index: {}]
  %s4 = sld [smem:[#allocation0]]
  $region38: #{tpu_custom_call.1} parent=0
    _
  %s6 = ssub.s32 1, %s4
  %s7 = scalar_select 0, %s6, %s4
  $region1: #{tpu_custom_call.1} parent=0
    #allocation2 [shape = 'u8[8192]{0}', space=vmem, size = 0x2000, scoped, tag = 'input window, operand 0, single buffered']
    #allocation3 [shape = 's32[1]{0}', space=sflag, size = 0x4, scoped, tag = 'scoped memory for tpu_custom_call.1']
    #allocation4 [shape = 's32[1]{0}', space=sflag, size = 0x4, scoped, tag = 'scoped memory for tpu_custom_call.1']
    #allocation5 [shape = 'u8[8192]{0}', space=vmem, size = 0x2000, scoped, tag = 'input window, operand 1, single buffered']
    #allocation6 [shape = 's32[1]{0}', space=sflag, size = 0x4, scoped, tag = 'scoped memory for tpu_custom_call.1']
    #allocation7 [shape = 'u8[8192]{0}', space=vmem, size = 0x2000, scoped, tag = 'input window, operand 2, single buffered']
    #allocation8 [shape = 'u8[4096]{0}', space=vmem, size = 0x1000, scoped, tag = 'output window, operand 0, single buffered']
    %8 = vsyncpa [#allocation3], 0
    %9 = vsyncpa [#allocation6], 0
    %10 = vsyncpa [#allocation4], 0
    // Predicated region
    $region2: #{tpu_custom_call.1} parent=1 // pred_check
      _
    $region3: #{tpu_custom_call.1} parent=1 // pred_check_branch
      %12 = sbr.rel (0) target = $region5
    $region4: #{tpu_custom_call.1} parent=1 // pred_region
      %s13 = sadd.s32 0, 0
      %p14 = scmp.lt.s32.totalorder %s13, 0
      %s15 = scalar_select %p14, %s13, 0
      %s16 = smul.u32 2, %s15
      %s18 = ssub.s32 256, 256
      %19 = vsyncadd [#allocation3], %s18
      %s20 = smul.addr %s16, 128
      %s21 = scalar_lea.hbm %s0, %s20
      %s22 = sshll.u32 [#allocation2], 4
      %s23 = int_to_ptr.vmem [resolvable:$true] %s22
      %28 = dma.hbm_to_vmem [thread:$0]  %s21, 256, %s23, [#allocation3], 128, 128, 8
    $region5: #{tpu_custom_call.1} parent=1 // pred_fallthru
      _
    // Predicated region
    $region6: #{tpu_custom_call.1} parent=1 // pred_check
      _
    $region7: #{tpu_custom_call.1} parent=1 // pred_check_branch
      %30 = sbr.rel (0) target = $region9
    $region8: #{tpu_custom_call.1} parent=1 // pred_region
      %s31 = sadd.s32 0, 0
      %p32 = scmp.lt.s32.totalorder %s31, 0
      %s33 = scalar_select %p32, %s31, 0
      %s34 = smul.u32 2, %s33
      %s36 = ssub.s32 256, 256
      %37 = vsyncadd [#allocation6], %s36
      %s38 = smul.addr %s34, 128
      %s39 = scalar_lea.hbm %s1, %s38
      %s40 = sshll.u32 [#allocation5], 4
      %s41 = int_to_ptr.vmem [resolvable:$true] %s40
      %46 = dma.hbm_to_vmem [thread:$0]  %s39, 256, %s41, [#allocation6], 128, 128, 8
    $region9: #{tpu_custom_call.1} parent=1 // pred_fallthru
      _
    // Predicated region
    $region10: #{tpu_custom_call.1} parent=1 // pred_check
      _
    $region11: #{tpu_custom_call.1} parent=1 // pred_check_branch
      %48 = sbr.rel (0) target = $region13
    $region12: #{tpu_custom_call.1} parent=1 // pred_region
      %s49 = sadd.s32 0, 0
      %p50 = scmp.lt.s32.totalorder %s49, 0
      %s51 = scalar_select %p50, %s49, 0
      %s52 = smul.u32 2, %s51
      %s54 = ssub.s32 256, 256
      %55 = vsyncadd [#allocation6], %s54
      %s56 = smul.addr %s52, 128
      %s57 = scalar_lea.hbm %s2, %s56
      %s58 = sshll.u32 [#allocation7], 4
      %s59 = int_to_ptr.vmem [resolvable:$true] %s58
      %64 = dma.hbm_to_vmem [thread:$0]  %s57, 256, %s59, [#allocation6], 128, 128, 8
    $region13: #{tpu_custom_call.1} parent=1 // pred_fallthru
      _
    // Predicated region
    $region14: #{tpu_custom_call.1} parent=1 // pred_check
      _
    $region15: #{tpu_custom_call.1} parent=1 // pred_check_branch
      %66 = sbr.rel (0) target = $region17
    $region16: #{tpu_custom_call.1} parent=1 // pred_region
      %67 = dma.done [#allocation3], 256
    $region17: #{tpu_custom_call.1} parent=1 // pred_fallthru
      _
    // Predicated region
    $region18: #{tpu_custom_call.1} parent=1 // pred_check
      _
    $region19: #{tpu_custom_call.1} parent=1 // pred_check_branch
      %69 = sbr.rel (0) target = $region21
    $region20: #{tpu_custom_call.1} parent=1 // pred_region
      %70 = dma.done [#allocation6], 256
    $region21: #{tpu_custom_call.1} parent=1 // pred_fallthru
      _
    // Predicated region
    $region22: #{tpu_custom_call.1} parent=1 // pred_check
      _
    $region23: #{tpu_custom_call.1} parent=1 // pred_check_branch
      %72 = sbr.rel (0) target = $region25
    $region24: #{tpu_custom_call.1} parent=1 // pred_region
      %73 = dma.done [#allocation6], 256
    $region25: #{tpu_custom_call.1} parent=1 // pred_fallthru
      _
    %s74 = sadd.s32 0, 0
    %p75 = scmp.lt.s32.totalorder %s74, 0
    %s76 = scalar_select %p75, %s74, 0
    %s77 = smul.u32 2, %s76
    %s78 = sadd.s32 0, 0
    %p79 = scmp.lt.s32.totalorder %s78, 0
    %s80 = scalar_select %p79, %s78, 0
    %s81 = smul.u32 2, %s80
    %s82 = sadd.s32 0, 0
    %p83 = scmp.lt.s32.totalorder %s82, 0
    %s84 = scalar_select %p83, %s82, 0
    %s85 = smul.u32 2, %s84
    %p86 = scmp.eq.s32.totalorder 0, 0
    // Predicated region
    $region26: #{tpu_custom_call.1} parent=1 // pred_check
      %p87 = pneg %p86
    $region27: #{tpu_custom_call.1} parent=1 // pred_check_branch
      %89 = sbr.rel (%p87) target = $region29
    $region28: #{tpu_custom_call.1} parent=1 // pred_region
      %90 = vst [vmem:[#allocation8] sm:$0xff] 0.0
    $region29: #{tpu_custom_call.1} parent=1 // pred_fallthru
      _
    %v91 = vld [vmem:[#allocation2] sm:$0xff]
    %v92 = vld [vmem:[#allocation2 + $0x8] sm:$0xff]
    %v93 = vld [vmem:[#allocation5] sm:$0xff]
    %v94 = vld [vmem:[#allocation5 + $0x8] sm:$0xff]
    %v95 = vsub.f32 %v91, %v93
    %v96 = vsub.f32 %v92, %v94
    %v97 = vmul.f32 %v95, %v95
    %v98 = vmul.f32 %v96, %v96
    %v99 = vld [vmem:[#allocation7] sm:$0xff]
    %v100 = vld [vmem:[#allocation7 + $0x8] sm:$0xff]
    %v101 = vmul.f32 %v97, %v99
    %v102 = vmul.f32 %v98, %v100
    %v103 = vld [vmem:[#allocation8] sm:$0xff]
    %v104 = vadd.f32 %v101, %v102
    %v105 = vadd.f32 %v103, %v104
    %106 = vst [vmem:[#allocation8] sm:$0xff] %v105
    // Predicated region
    $region30: #{tpu_custom_call.1} parent=1 // pred_check
      _
    $region31: #{tpu_custom_call.1} parent=1 // pred_check_branch
      %108 = sbr.rel (0) target = $region33
    $region32: #{tpu_custom_call.1} parent=1 // pred_region
      %s110 = ssub.s32 128, 128
      %111 = vsyncadd [#allocation4], %s110
      %s113 = sshll.u32 [#allocation8], 4
      %s114 = int_to_ptr.vmem [resolvable:$true] %s113
      %116 = dma.vmem_to_hbm [thread:$0]  %s114, 128, %s3, [#allocation4]
    $region33: #{tpu_custom_call.1} parent=1 // pred_fallthru
      _
    // Predicated region
    $region34: #{tpu_custom_call.1} parent=1 // pred_check
      _
    $region35: #{tpu_custom_call.1} parent=1 // pred_check_branch
      %118 = sbr.rel (0) target = $region37
    $region36: #{tpu_custom_call.1} parent=1 // pred_region
      %119 = dma.done [#allocation4], 128
    $region37: #{tpu_custom_call.1} parent=1 // pred_fallthru
      _
    %120 = vsyncpa [#allocation3], 1
    %121 = vsyncpa [#allocation6], 1
    %122 = vsyncpa [#allocation4], 1

</llo_original>
